<compile_context>
chip_gen: v7x
topology: tpu7x:2x2x1
jax: 0.10.0
libtpu: 0.0.40
codegen_flags: <defaults>
</compile_context>

<pallas_src>
import math

import jax
import jax.numpy as jnp
from jax.experimental import pallas as pl
from jax.experimental.pallas import tpu as pltpu


def planar_kernel(x_ref, obs_ref, w_ref, u_ref, b_ref, wu_ref, z_ref, logdet_ref):
    # Transposed layout: batch on lanes (fast axis), feature dim D on sublanes.
    x = x_ref[...]          # (D, TB)
    obs = obs_ref[...]      # (1, TB)
    w = w_ref[...]          # (D, 1)
    u = u_ref[...]          # (D, 1)   -- already the tanh-corrected u_hat
    b = b_ref[...]          # (1, 1)
    wu = wu_ref[...]        # (1, 1)   -- precomputed w · u_hat (hoisted out of kernel)

    # lin = x·w (reduce over the D sublanes, per lane/column) + b * observation
    xw = jnp.sum(x * w, axis=0, keepdims=True)         # (1, TB)
    lin = xw + b * obs                                  # (1, TB)
    t = jnp.tanh(lin)                                   # (1, TB)  lane-packed EUP

    # z = x + u_hat * tanh(lin)  -- lane-dense, unmasked store
    z_ref[...] = x + u * t                              # (D, TB)

    # phi @ u_hat = (1 - tanh(lin)^2) * (w · u_hat)  -> per-column scalar
    phi_u = (1.0 - t * t) * wu                          # (1, TB)
    logdet_ref[...] = jnp.log(jnp.abs(1.0 + phi_u) + 1e-4)


def planar_forward(x, observation, w, u, b, *, max_block_b=8192):
    B, D = x.shape
    f32 = jnp.float32

    # ---- parameter fix-up (tiny scalar math on parameters -> plain JAX glue) ----
    w1 = w.reshape(-1).astype(f32)
    u1 = u.reshape(-1).astype(f32)
    wu0 = jnp.dot(w1, u1)
    scal = jax.nn.softplus(wu0) - wu0 - 1.0            # overflow-safe softplus
    u_hat = u1 + scal * w1 / jnp.sum(w1 * w1)
    wu_hat = jnp.dot(w1, u_hat)                        # loop-invariant, hoisted

    w_col = w1.reshape(D, 1)
    u_col = u_hat.reshape(D, 1)
    b2 = b.reshape(1, 1).astype(f32)
    wu2 = wu_hat.reshape(1, 1)

    # ---- lane-dense layout: put B on lanes, pad to a multiple of 128 ----
    block_b = min(max_block_b, pl.cdiv(B, 128) * 128)  # multiple of 128, VMEM-cheap
    Bp = pl.cdiv(B, block_b) * block_b
    pad = Bp - B
    x_t = jnp.pad(x.astype(f32).T, ((0, 0), (0, pad)))                          # (D, Bp)
    obs_t = jnp.pad(observation.astype(f32).reshape(1, -1), ((0, 0), (0, pad)))  # (1, Bp)

    grid = (Bp // block_b,)

    z_t, logdet_t = pl.pallas_call(
        planar_kernel,
        out_shape=(
            jax.ShapeDtypeStruct((D, Bp), f32),
            jax.ShapeDtypeStruct((1, Bp), f32),
        ),
        grid_spec=pltpu.PrefetchScalarGridSpec(
            num_scalar_prefetch=0,
            grid=grid,
            in_specs=[
                pl.BlockSpec((D, block_b), lambda i: (0, i)),   # x tile (lane-dense)
                pl.BlockSpec((1, block_b), lambda i: (0, i)),   # observation tile
                pl.BlockSpec((D, 1), lambda i: (0, 0)),          # w       (VMEM-resident)
                pl.BlockSpec((D, 1), lambda i: (0, 0)),          # u_hat   (VMEM-resident)
                pl.BlockSpec((1, 1), lambda i: (0, 0)),          # b
                pl.BlockSpec((1, 1), lambda i: (0, 0)),          # w·u_hat (precomputed)
            ],
            out_specs=[
                pl.BlockSpec((D, block_b), lambda i: (0, i)),
                pl.BlockSpec((1, block_b), lambda i: (0, i)),
            ],
        ),
        compiler_params=pltpu.CompilerParams(
            dimension_semantics=("parallel",)),
    )(x_t, obs_t, w_col, u_col, b2, wu2)

    # back to the PyTorch-facing layout; torch's z.squeeze(-1) is a no-op for D > 1
    z = z_t[:, :B].T                  # (B, D)
    log_det = logdet_t[0, :B]         # (B,)
    return z, log_det


def planar_reference(x, observation, w, u, b):
    # Pure-JAX reference mirroring the PyTorch forward (tanh branch).
    wu = jnp.dot(w, u)
    scal = jnp.log1p(jnp.exp(wu)) - wu - 1.0
    u_hat = u + scal * w / (jnp.linalg.norm(w) ** 2)
    lin = (x @ w)[..., None] + b * observation
    z = x + u_hat * jnp.tanh(lin)
    phi = (1.0 - jnp.tanh(lin) ** 2) * w
    log_det = jnp.log(jnp.abs(1.0 + phi @ u_hat) + 1e-4)
    return z, log_det


if __name__ == "__main__":
    # Non-multiple-of-128 batch exercises the lane-padding path.
    B, D = 300, 8
    key = jax.random.PRNGKey(0)
    kx, kobs, kw, ku, kb = jax.random.split(key, 5)

    bound = math.sqrt(1.0 / D)
    # deterministic "reset_parameters": uniform(-sqrt(1/dim), sqrt(1/dim))
    w = jax.random.uniform(kw, (D,), jnp.float32, -bound, bound)
    u = jax.random.uniform(ku, (D,), jnp.float32, -bound, bound)
    b = jax.random.uniform(kb, (1,), jnp.float32, -bound, bound)

    x = jax.random.normal(kx, (B, D), jnp.float32)
    observation = jax.random.normal(kobs, (B, 1), jnp.float32)

    # max_block_b=128 keeps the demo tiny while exercising a multi-step grid;
    # production default (8192) is still well under scoped VMEM on v5e/v6e/v7x.
    z, log_det = planar_forward(x, observation, w, u, b, max_block_b=128)
    jax.block_until_ready((z, log_det))

    z_ref, ld_ref = planar_reference(x, observation, w, u, b)
    assert z.shape == (B, D) and log_det.shape == (B,)
    assert jnp.allclose(z, z_ref, atol=1e-5, rtol=1e-5)
    assert jnp.allclose(log_det, ld_ref, atol=1e-5, rtol=1e-5)

    print("KERNEL_OK")
</pallas_src>

<mosaic_0001>
module attributes {stable_mosaic.version = 11 : i64} {
  func.func @planar_kernel(%arg0: i32, %arg1: memref<8x128xf32, #tpu.memory_space<vmem>>, %arg2: memref<1x128xf32, #tpu.memory_space<vmem>>, %arg3: memref<8x1xf32, #tpu.memory_space<vmem>>, %arg4: memref<8x1xf32, #tpu.memory_space<vmem>>, %arg5: memref<1x1xf32, #tpu.memory_space<vmem>>, %arg6: memref<1x1xf32, #tpu.memory_space<vmem>>, %arg7: memref<8x128xf32, #tpu.memory_space<vmem>>, %arg8: memref<1x128xf32, #tpu.memory_space<vmem>>) attributes {dimension_semantics = [#tpu.dimension_semantics<parallel>], iteration_bounds = array<i64: 3>, scalar_prefetch = 0 : i64, scratch_operands = 0 : i64, tpu.core_type = #tpu.core_type<tc>, window_params = [{transform_indices = @transform_0, window_bounds = array<i64: 8, 128>}, {transform_indices = @transform_1, window_bounds = array<i64: 1, 128>}, {pipeline_mode = #tpu.pipeline_mode<synchronous>, transform_indices = @transform_2, window_bounds = array<i64: 8, 1>}, {pipeline_mode = #tpu.pipeline_mode<synchronous>, transform_indices = @transform_3, window_bounds = array<i64: 8, 1>}, {pipeline_mode = #tpu.pipeline_mode<synchronous>, transform_indices = @transform_4, window_bounds = array<i64: 1, 1>}, {pipeline_mode = #tpu.pipeline_mode<synchronous>, transform_indices = @transform_5, window_bounds = array<i64: 1, 1>}, {transform_indices = @transform_6, window_bounds = array<i64: 8, 128>}, {transform_indices = @transform_7, window_bounds = array<i64: 1, 128>}]} {
    %c0 = arith.constant 0 : index
    %c0_0 = arith.constant 0 : index
    %0 = vector.load %arg1[%c0, %c0_0] : memref<8x128xf32, #tpu.memory_space<vmem>>, vector<8x128xf32>
    %c0_1 = arith.constant 0 : index
    %c0_2 = arith.constant 0 : index
    %1 = vector.load %arg2[%c0_1, %c0_2] : memref<1x128xf32, #tpu.memory_space<vmem>>, vector<1x128xf32>
    %c0_3 = arith.constant 0 : index
    %c0_4 = arith.constant 0 : index
    %2 = vector.load %arg3[%c0_3, %c0_4] : memref<8x1xf32, #tpu.memory_space<vmem>>, vector<8x1xf32>
    %c0_5 = arith.constant 0 : index
    %c0_6 = arith.constant 0 : index
    %3 = vector.load %arg4[%c0_5, %c0_6] : memref<8x1xf32, #tpu.memory_space<vmem>>, vector<8x1xf32>
    %c0_7 = arith.constant 0 : index
    %c0_8 = arith.constant 0 : index
    %4 = vector.load %arg5[%c0_7, %c0_8] : memref<1x1xf32, #tpu.memory_space<vmem>>, vector<1x1xf32>
    %c0_9 = arith.constant 0 : index
    %c0_10 = arith.constant 0 : index
    %5 = vector.load %arg6[%c0_9, %c0_10] : memref<1x1xf32, #tpu.memory_space<vmem>>, vector<1x1xf32>
    %6 = vector.broadcast %2 : vector<8x1xf32> to vector<8x128xf32>
    %7 = arith.mulf %0, %6 : vector<8x128xf32>
    %cst = arith.constant dense<0.000000e+00> : vector<128xf32>
    %8 = vector.multi_reduction <add>, %7, %cst [0] : vector<8x128xf32> to vector<128xf32>
    %9 = vector.shape_cast %8 : vector<128xf32> to vector<1x128xf32>
    %10 = vector.broadcast %4 : vector<1x1xf32> to vector<1x128xf32>
    %11 = arith.mulf %10, %1 : vector<1x128xf32>
    %12 = arith.addf %9, %11 : vector<1x128xf32>
    %13 = math.tanh %12 : vector<1x128xf32>
    %14 = vector.broadcast %3 : vector<8x1xf32> to vector<8x128xf32>
    %15 = vector.broadcast %13 : vector<1x128xf32> to vector<8x128xf32>
    %16 = arith.mulf %14, %15 : vector<8x128xf32>
    %17 = arith.addf %0, %16 : vector<8x128xf32>
    %c0_11 = arith.constant 0 : index
    %c0_12 = arith.constant 0 : index
    %18 = vector.load %arg7[%c0_11, %c0_12] : memref<8x128xf32, #tpu.memory_space<vmem>>, vector<8x128xf32>
    tpu.vector_store %arg7[%c0_11, %c0_12], %17 {strides = array<i32>} : memref<8x128xf32, #tpu.memory_space<vmem>>, vector<8x128xf32>,
    %19 = arith.mulf %13, %13 : vector<1x128xf32>
    %cst_13 = arith.constant 1.000000e+00 : f32
    %20 = vector.broadcast %cst_13 : f32 to vector<1x128xf32>
    %21 = arith.subf %20, %19 : vector<1x128xf32>
    %22 = vector.broadcast %5 : vector<1x1xf32> to vector<1x128xf32>
    %23 = arith.mulf %21, %22 : vector<1x128xf32>
    %cst_14 = arith.constant 1.000000e+00 : f32
    %24 = vector.broadcast %cst_14 : f32 to vector<1x128xf32>
    %25 = arith.addf %24, %23 : vector<1x128xf32>
    %26 = math.absf %25 : vector<1x128xf32>
    %cst_15 = arith.constant 9.99999974E-5 : f32
    %27 = vector.broadcast %cst_15 : f32 to vector<1x128xf32>
    %28 = arith.addf %26, %27 : vector<1x128xf32>
    %29 = math.log %28 : vector<1x128xf32>
    %c0_16 = arith.constant 0 : index
    %c0_17 = arith.constant 0 : index
    %30 = vector.load %arg8[%c0_16, %c0_17] : memref<1x128xf32, #tpu.memory_space<vmem>>, vector<1x128xf32>
    tpu.vector_store %arg8[%c0_16, %c0_17], %29 {strides = array<i32>} : memref<1x128xf32, #tpu.memory_space<vmem>>, vector<1x128xf32>,
    return
  }
  func.func @transform_0(%arg0: i32) -> (i32, i32) {
    %c0_i32 = arith.constant 0 : i32
    %c0_i32_0 = arith.constant 0 : i32
    return %c0_i32, %arg0 : i32, i32
  }
  func.func @transform_1(%arg0: i32) -> (i32, i32) {
    %c0_i32 = arith.constant 0 : i32
    %c0_i32_0 = arith.constant 0 : i32
    return %c0_i32, %arg0 : i32, i32
  }
  func.func @transform_2(%arg0: i32) -> (i32, i32) {
    %c0_i32 = arith.constant 0 : i32
    %c0_i32_0 = arith.constant 0 : i32
    %c0_i32_1 = arith.constant 0 : i32
    return %c0_i32, %c0_i32_0 : i32, i32
  }
  func.func @transform_3(%arg0: i32) -> (i32, i32) {
    %c0_i32 = arith.constant 0 : i32
    %c0_i32_0 = arith.constant 0 : i32
    %c0_i32_1 = arith.constant 0 : i32
    return %c0_i32, %c0_i32_0 : i32, i32
  }
  func.func @transform_4(%arg0: i32) -> (i32, i32) {
    %c0_i32 = arith.constant 0 : i32
    %c0_i32_0 = arith.constant 0 : i32
    %c0_i32_1 = arith.constant 0 : i32
    return %c0_i32, %c0_i32_0 : i32, i32
  }
  func.func @transform_5(%arg0: i32) -> (i32, i32) {
    %c0_i32 = arith.constant 0 : i32
    %c0_i32_0 = arith.constant 0 : i32
    %c0_i32_1 = arith.constant 0 : i32
    return %c0_i32, %c0_i32_0 : i32, i32
  }
  func.func @transform_6(%arg0: i32) -> (i32, i32) {
    %c0_i32 = arith.constant 0 : i32
    %c0_i32_0 = arith.constant 0 : i32
    return %c0_i32, %arg0 : i32, i32
  }
  func.func @transform_7(%arg0: i32) -> (i32, i32) {
    %c0_i32 = arith.constant 0 : i32
    %c0_i32_0 = arith.constant 0 : i32
    return %c0_i32, %arg0 : i32, i32
  }
}

</mosaic_0001>

<llo_original>
// kernel: tpu_custom_call.1
$region0: #{tpu_custom_call.1}
  #allocation0 [shape = 'u32[]', space=smem, size = 0x4, offset = 0x4, fixed_abs, tag = 'smem constant byte address 0x4 - core index']
  #allocation1 [shape = 'u32[144,128]{1,0:T(1,128)}', space=vmem, size = 0x12000, scoped, tag = 'internal scratch']
  #allocation2 [shape = 'f32[1,1]{1,0:T(1,128)S(1)}', space=vmem, size = 0x200, scoped, tag = 'scoped memory for tpu_custom_call.1']
  #allocation3 [shape = 'f32[1,1]{1,0:T(1,128)S(1)}', space=vmem, size = 0x200, scoped, tag = 'scoped memory for tpu_custom_call.1']
  %s0 = inlined_call_operand.vmem [shape: f32[8,384], index: 0, kind: input, shape index: {}]
  %s1 = inlined_call_operand.vmem [shape: f32[1,384], index: 1, kind: input, shape index: {}]
  %s2 = inlined_call_operand.vmem [shape: f32[8,1], index: 2, kind: input, shape index: {}]
  %s3 = inlined_call_operand.vmem [shape: f32[8,1], index: 3, kind: input, shape index: {}]
  %s4 = inlined_call_operand.<no memory space> [shape: f32[1,1], index: 4, kind: input, shape index: {}]
  %s5 = inlined_call_operand.<no memory space> [shape: f32[1,1], index: 5, kind: input, shape index: {}]
  %s6 = inlined_call_operand.hbm [shape: f32[8,384], index: 6, kind: output, shape index: {0}]
  %s7 = inlined_call_operand.hbm [shape: f32[1,384], index: 7, kind: output, shape index: {1}]
  %8 = xla_tuple %s6, %s7
  %s9 = sld [smem:[#allocation0]]
  $region65: #{tpu_custom_call.1} parent=0
    _
  %s11 = ssub.s32 1, %s9
  %s12 = scalar_select 0, %s11, %s9
  %v13 = vstv %s4
  %14 = vst [vmem:[#allocation2] sm:$0x1] %v13
  %v15 = vstv %s5
  %16 = vst [vmem:[#allocation3] sm:$0x1] %v15
  $region1: #{tpu_custom_call.1} parent=0
    #allocation4 [shape = 'u8[8192]{0}', space=vmem, size = 0x2000, scoped, tag = 'output window, operand 0']
    #allocation5 [shape = 's32[2]{0}', space=sflag, size = 0x8, scoped, tag = 'scoped memory for tpu_custom_call.1']
    #allocation6 [shape = 'u8[1024]{0}', space=vmem, size = 0x400, scoped, tag = 'output window, operand 1']
    #allocation7 [shape = 's32[2]{0}', space=sflag, size = 0x8, scoped, tag = 'scoped memory for tpu_custom_call.1']
    %17 = vsyncpa [#allocation5], 0
    %s18 = scalar_lea.sflag [#allocation5], 1
    %19 = vsyncpa %s18, 0
    %20 = vsyncpa [#allocation7], 0
    %s21 = scalar_lea.sflag [#allocation7], 1
    %22 = vsyncpa %s21, 0
    loop: start=0, step=1, limit=5
    $region2: #{tpu_custom_call.1} parent=1 // loop_pre_header
      _
    $region3: #{tpu_custom_call.1} parent=1 // loop_header
      %s24 = sphi 0, %s28
      %p25 = scmp.ge.s32.totalorder %s24, 5
      %s34 = sphi 0, %s36
      %s37 = sphi 0, %s34
      %s38 = sphi 0, %s37
      %s54 = sphi 0, %s38
      %s60 = sphi 0, %s62
      %s63 = sphi 0, %s60
      %s64 = sphi 0, %s63
      %s80 = sphi 0, %s64
      %s84 = sphi 0, %s84
      %s86 = sphi 0, %s84
      %s87 = sphi 0, %s86
      %s101 = sphi 0, %s87
      %s105 = sphi 0, %s105
      %s107 = sphi 0, %s105
      %s108 = sphi 0, %s107
      %s122 = sphi 0, %s108
      %s126 = sphi 0, %s126
      %s128 = sphi 0, %s126
      %s129 = sphi 0, %s128
      %s143 = sphi 0, %s129
      %s147 = sphi 0, %s147
      %s149 = sphi 0, %s147
      %s150 = sphi 0, %s149
      %s164 = sphi 0, %s150
      %s170 = sphi 0, %s172
      %s173 = sphi 0, %s170
      %s174 = sphi 0, %s173
      %s190 = sphi 0, %s174
      %s196 = sphi 0, %s198
      %s199 = sphi 0, %s196
      %s200 = sphi 0, %s199
      %s216 = sphi 0, %s200
    $region4: #{tpu_custom_call.1} parent=1 // loop_header_branch
      %27 = sbr.rel (%p25) target = $region8
    $region5: #{tpu_custom_call.1} parent=1 // loop_body
      %s29 = ssub.s32 %s24, 1
      %s30 = ssub.s32 %s24, 2
      %s31 = sadd.s32 %s24, 1
      %s32 = ssub.s32 %s24, %s31
      %p33 = scmp.eq.s32.totalorder %s32, 0
      %s35 = sadd.s32 %s34, 1
      %s36 = scalar_select %p33, %s34, %s35
      %p39 = pneg %p33
      %p40 = scmp.eq.s32.totalorder %s24, 2
      %p41 = por %p39, %p40
      %p42 = scmp.ne.s32.totalorder %s34, %s37
      %p43 = scmp.eq.s32.totalorder %s24, 0
      %p44 = por %p42, %p43
      %p45 = scmp.ne.s32.totalorder %s34, %s37
      %p46 = scmp.eq.s32.totalorder %s29, 2
      %p47 = por %p45, %p46
      %p48 = scmp.ne.s32.totalorder %s37, %s38
      %p49 = scmp.eq.s32.totalorder %s29, 0
      %p50 = por %p48, %p49
      %p51 = scmp.ne.s32.totalorder %s37, %s38
      %p52 = scmp.eq.s32.totalorder %s30, 2
      %p53 = por %p51, %p52
      %p55 = scmp.ne.s32.totalorder %s38, %s54
      %p56 = scmp.eq.s32.totalorder %s30, 0
      %p57 = por %p55, %p56
      %s58 = ssub.s32 %s24, %s31
      %p59 = scmp.eq.s32.totalorder %s58, 0
      %s61 = sadd.s32 %s60, 1
      %s62 = scalar_select %p59, %s60, %s61
      %p65 = pneg %p59
      %p66 = scmp.eq.s32.totalorder %s24, 2
      %p67 = por %p65, %p66
      %p68 = scmp.ne.s32.totalorder %s60, %s63
      %p69 = scmp.eq.s32.totalorder %s24, 0
      %p70 = por %p68, %p69
      %p71 = scmp.ne.s32.totalorder %s60, %s63
      %p72 = scmp.eq.s32.totalorder %s29, 2
      %p73 = por %p71, %p72
      %p74 = scmp.ne.s32.totalorder %s63, %s64
      %p75 = scmp.eq.s32.totalorder %s29, 0
      %p76 = por %p74, %p75
      %p77 = scmp.ne.s32.totalorder %s63, %s64
      %p78 = scmp.eq.s32.totalorder %s30, 2
      %p79 = por %p77, %p78
      %p81 = scmp.ne.s32.totalorder %s64, %s80
      %p82 = scmp.eq.s32.totalorder %s30, 0
      %p83 = por %p81, %p82
      %s85 = sadd.s32 %s84, 1
      %p88 = scmp.eq.s32.totalorder %s24, 2
      %p89 = scmp.ne.s32.totalorder %s84, %s86
      %p90 = scmp.eq.s32.totalorder %s24, 0
      %p91 = por %p89, %p90
      %p92 = scmp.ne.s32.totalorder %s84, %s86
      %p93 = scmp.eq.s32.totalorder %s29, 2
      %p94 = por %p92, %p93
      %p95 = scmp.ne.s32.totalorder %s86, %s87
      %p96 = scmp.eq.s32.totalorder %s29, 0
      %p97 = por %p95, %p96
      %p98 = scmp.ne.s32.totalorder %s86, %s87
      %p99 = scmp.eq.s32.totalorder %s30, 2
      %p100 = por %p98, %p99
      %p102 = scmp.ne.s32.totalorder %s87, %s101
      %p103 = scmp.eq.s32.totalorder %s30, 0
      %p104 = por %p102, %p103
      %s106 = sadd.s32 %s105, 1
      %p109 = scmp.eq.s32.totalorder %s24, 2
      %p110 = scmp.ne.s32.totalorder %s105, %s107
      %p111 = scmp.eq.s32.totalorder %s24, 0
      %p112 = por %p110, %p111
      %p113 = scmp.ne.s32.totalorder %s105, %s107
      %p114 = scmp.eq.s32.totalorder %s29, 2
      %p115 = por %p113, %p114
      %p116 = scmp.ne.s32.totalorder %s107, %s108
      %p117 = scmp.eq.s32.totalorder %s29, 0
      %p118 = por %p116, %p117
      %p119 = scmp.ne.s32.totalorder %s107, %s108
      %p120 = scmp.eq.s32.totalorder %s30, 2
      %p121 = por %p119, %p120
      %p123 = scmp.ne.s32.totalorder %s108, %s122
      %p124 = scmp.eq.s32.totalorder %s30, 0
      %p125 = por %p123, %p124
      %s127 = sadd.s32 %s126, 1
      %p130 = scmp.eq.s32.totalorder %s24, 2
      %p131 = scmp.ne.s32.totalorder %s126, %s128
      %p132 = scmp.eq.s32.totalorder %s24, 0
      %p133 = por %p131, %p132
      %p134 = scmp.ne.s32.totalorder %s126, %s128
      %p135 = scmp.eq.s32.totalorder %s29, 2
      %p136 = por %p134, %p135
      %p137 = scmp.ne.s32.totalorder %s128, %s129
      %p138 = scmp.eq.s32.totalorder %s29, 0
      %p139 = por %p137, %p138
      %p140 = scmp.ne.s32.totalorder %s128, %s129
      %p141 = scmp.eq.s32.totalorder %s30, 2
      %p142 = por %p140, %p141
      %p144 = scmp.ne.s32.totalorder %s129, %s143
      %p145 = scmp.eq.s32.totalorder %s30, 0
      %p146 = por %p144, %p145
      %s148 = sadd.s32 %s147, 1
      %p151 = scmp.eq.s32.totalorder %s24, 2
      %p152 = scmp.ne.s32.totalorder %s147, %s149
      %p153 = scmp.eq.s32.totalorder %s24, 0
      %p154 = por %p152, %p153
      %p155 = scmp.ne.s32.totalorder %s147, %s149
      %p156 = scmp.eq.s32.totalorder %s29, 2
      %p157 = por %p155, %p156
      %p158 = scmp.ne.s32.totalorder %s149, %s150
      %p159 = scmp.eq.s32.totalorder %s29, 0
      %p160 = por %p158, %p159
      %p161 = scmp.ne.s32.totalorder %s149, %s150
      %p162 = scmp.eq.s32.totalorder %s30, 2
      %p163 = por %p161, %p162
      %p165 = scmp.ne.s32.totalorder %s150, %s164
      %p166 = scmp.eq.s32.totalorder %s30, 0
      %p167 = por %p165, %p166
      %s168 = ssub.s32 %s24, %s31
      %p169 = scmp.eq.s32.totalorder %s168, 0
      %s171 = sadd.s32 %s170, 1
      %s172 = scalar_select %p169, %s170, %s171
      %p175 = pneg %p169
      %p176 = scmp.eq.s32.totalorder %s24, 2
      %p177 = por %p175, %p176
      %p178 = scmp.ne.s32.totalorder %s170, %s173
      %p179 = scmp.eq.s32.totalorder %s24, 0
      %p180 = por %p178, %p179
      %p181 = scmp.ne.s32.totalorder %s170, %s173
      %p182 = scmp.eq.s32.totalorder %s29, 2
      %p183 = por %p181, %p182
      %p184 = scmp.ne.s32.totalorder %s173, %s174
      %p185 = scmp.eq.s32.totalorder %s29, 0
      %p186 = por %p184, %p185
      %p187 = scmp.ne.s32.totalorder %s173, %s174
      %p188 = scmp.eq.s32.totalorder %s30, 2
      %p189 = por %p187, %p188
      %p191 = scmp.ne.s32.totalorder %s174, %s190
      %p192 = scmp.eq.s32.totalorder %s30, 0
      %p193 = por %p191, %p192
      %s194 = ssub.s32 %s24, %s31
      %p195 = scmp.eq.s32.totalorder %s194, 0
      %s197 = sadd.s32 %s196, 1
      %s198 = scalar_select %p195, %s196, %s197
      %p201 = pneg %p195
      %p202 = scmp.eq.s32.totalorder %s24, 2
      %p203 = por %p201, %p202
      %p204 = scmp.ne.s32.totalorder %s196, %s199
      %p205 = scmp.eq.s32.totalorder %s24, 0
      %p206 = por %p204, %p205
      %p207 = scmp.ne.s32.totalorder %s196, %s199
      %p208 = scmp.eq.s32.totalorder %s29, 2
      %p209 = por %p207, %p208
      %p210 = scmp.ne.s32.totalorder %s199, %s200
      %p211 = scmp.eq.s32.totalorder %s29, 0
      %p212 = por %p210, %p211
      %p213 = scmp.ne.s32.totalorder %s199, %s200
      %p214 = scmp.eq.s32.totalorder %s30, 2
      %p215 = por %p213, %p214
      %p217 = scmp.ne.s32.totalorder %s200, %s216
      %p218 = scmp.eq.s32.totalorder %s30, 0
      %p219 = por %p217, %p218
      %p220 = scmp.le.s32.totalorder 1, %s24
      %p221 = scmp.lt.s32.totalorder %s24, 4
      %p222 = pnand %p220, %p221
      %p223 = pneg %p222
      // Predicated region
      $region9: #{tpu_custom_call.1} parent=5 // pred_check
        _
      $region10: #{tpu_custom_call.1} parent=5 // pred_check_branch
        %225 = sbr.rel (%p222) target = $region12
      $region11: #{tpu_custom_call.1} parent=5 // pred_region
        %s226 = ssub.s32 %s24, 1
        // Predicated region
        $region13: #{tpu_custom_call.1} parent=11 // pred_check
          %p227 = pneg %p97
        $region14: #{tpu_custom_call.1} parent=11 // pred_check_branch
          %229 = sbr.rel (%p227) target = $region16
        $region15: #{tpu_custom_call.1} parent=11 // pred_region
          _
        $region16: #{tpu_custom_call.1} parent=11 // pred_fallthru
          _
        // Predicated region
        $region17: #{tpu_custom_call.1} parent=11 // pred_check
          %p230 = pneg %p118
        $region18: #{tpu_custom_call.1} parent=11 // pred_check_branch
          %232 = sbr.rel (%p230) target = $region20
        $region19: #{tpu_custom_call.1} parent=11 // pred_region
          _
        $region20: #{tpu_custom_call.1} parent=11 // pred_fallthru
          _
        // Predicated region
        $region21: #{tpu_custom_call.1} parent=11 // pred_check
          %p233 = pneg %p139
        $region22: #{tpu_custom_call.1} parent=11 // pred_check_branch
          %235 = sbr.rel (%p233) target = $region24
        $region23: #{tpu_custom_call.1} parent=11 // pred_region
          _
        $region24: #{tpu_custom_call.1} parent=11 // pred_fallthru
          _
        // Predicated region
        $region25: #{tpu_custom_call.1} parent=11 // pred_check
          %p236 = pneg %p160
        $region26: #{tpu_custom_call.1} parent=11 // pred_check_branch
          %238 = sbr.rel (%p236) target = $region28
        $region27: #{tpu_custom_call.1} parent=11 // pred_region
          _
        $region28: #{tpu_custom_call.1} parent=11 // pred_fallthru
          _
      $region12: #{tpu_custom_call.1} parent=5 // pred_fallthru
        _
      %p239 = scmp.lt.s32.totalorder %s24, 3
      // Predicated region
      $region29: #{tpu_custom_call.1} parent=5 // pred_check
        %p240 = pneg %p239
      $region30: #{tpu_custom_call.1} parent=5 // pred_check_branch
        %242 = sbr.rel (%p240) target = $region32
      $region31: #{tpu_custom_call.1} parent=5 // pred_region
        // Predicated region
        $region33: #{tpu_custom_call.1} parent=31 // pred_check
          %p243 = pneg %p44
        $region34: #{tpu_custom_call.1} parent=31 // pred_check_branch
          %245 = sbr.rel (%p243) target = $region36
        $region35: #{tpu_custom_call.1} parent=31 // pred_region
          %p246 = scmp.lt.s32.totalorder %s24, 2
          %s247 = scalar_select %p246, %s24, 2
          %s248 = smul.addr %s247, 8
          %s249 = scalar_lea.vmem %s0, %s248
        $region36: #{tpu_custom_call.1} parent=31 // pred_fallthru
          _
        // Predicated region
        $region37: #{tpu_custom_call.1} parent=31 // pred_check
          %p250 = pneg %p70
        $region38: #{tpu_custom_call.1} parent=31 // pred_check_branch
          %252 = sbr.rel (%p250) target = $region40
        $region39: #{tpu_custom_call.1} parent=31 // pred_region
          %p253 = scmp.lt.s32.totalorder %s24, 2
          %s254 = scalar_select %p253, %s24, 2
          %s255 = scalar_lea.vmem %s1, %s254
        $region40: #{tpu_custom_call.1} parent=31 // pred_fallthru
          _
      $region32: #{tpu_custom_call.1} parent=5 // pred_fallthru
        _
      %p256 = scmp.le.s32.totalorder 1, %s24
      %p257 = scmp.lt.s32.totalorder %s24, 4
      %p258 = pnand %p256, %p257
      %p259 = pneg %p258
      // Predicated region
      $region41: #{tpu_custom_call.1} parent=5 // pred_check
        _
      $region42: #{tpu_custom_call.1} parent=5 // pred_check_branch
        %261 = sbr.rel (%p258) target = $region44
      $region43: #{tpu_custom_call.1} parent=5 // pred_region
        %s262 = ssub.s32 %s24, 1
        %p263 = scmp.lt.s32.totalorder %s29, 2
        %s264 = scalar_select %p263, %s29, 2
        %s265 = smul.addr %s264, 8
        %s266 = scalar_lea.vmem %s0, %s265
        %p267 = pneg %p50
        %p268 = pneg %p47
        %p269 = scmp.lt.s32.totalorder %s29, 2
        %s270 = scalar_select %p269, %s29, 2
        %s271 = scalar_lea.vmem %s1, %s270
        %p272 = pneg %p76
        %p273 = pneg %p73
        %p274 = pneg %p97
        %p275 = pneg %p94
        %p276 = pneg %p118
        %p277 = pneg %p115
        %p278 = pneg %p139
        %p279 = pneg %p136
        %p280 = pneg %p160
        %p281 = pneg %p157
        %p282 = pneg %p186
        %p283 = pneg %p183
        %s284 = sand.u32 %s173, 1
        %s285 = scalar_lea.sflag [#allocation5], %s284
        %s286 = sand.u32 %s173, 1
        %s287 = smul.addr %s286, 8
        %s288 = scalar_lea.vmem [#allocation4], %s287
        %p289 = pneg %p212
        %p290 = pneg %p209
        %s291 = sand.u32 %s199, 1
        %s292 = scalar_lea.sflag [#allocation7], %s291
        %s293 = sand.u32 %s199, 1
        %s294 = scalar_lea.vmem [#allocation6], %s293
        %p295 = scmp.lt.s32.totalorder %s29, 2
        %s296 = scalar_select %p295, %s29, 2
        %s297 = smul.addr %s296, 8
        %s298 = scalar_lea.vmem %s0, %s297
        %p299 = scmp.lt.s32.totalorder %s29, 2
        %s300 = scalar_select %p299, %s29, 2
        %s301 = scalar_lea.vmem %s1, %s300
        %v302 = vld [vmem:[%s298] sm:$0xff]
        %v303 = vld [vmem:[%s301] sm:$0x1]
        %v304 = vld [vmem:[%s2] sm:$0xff]
        %v305 = vld [vmem:[%s3] sm:$0xff]
        %v306 = vld [vmem:[#allocation2] sm:$0x1]
        %v307 = vld [vmem:[#allocation3] sm:$0x1]
        %309 = vset.pattern.permute.xlu0 0
        %310 = vperm.xlu0 %309, %v304
        %v311 = vpop.permute.xlu0 %310
        %v313 = vmul.f32 %v302, %v311
        %v314 = vrot.slane %v313, 4
        %v315 = vadd.f32 %v313, %v314
        %v316 = vrot.slane %v315, 2
        %v317 = vadd.f32 %v315, %v316
        %v318 = vrot.slane %v317, 1
        %v319 = vadd.f32 %v317, %v318
        %321 = vset.pattern.permute.xlu0 0
        %322 = vperm.xlu0 %321, %v306
        %v323 = vpop.permute.xlu0 %322
        %v325 = vlaneseq
        %v326 = vshrl.u32 %v325, 7
        %v327 = vsub.s32 0, %v326
        %v328 = vrot.slane %v323, %v327
        %v329 = vmul.f32 %v328, %v303
        %v330 = vadd.f32 %v319, %v329
        %v331 = vtanh.pop %v330
        %333 = vset.pattern.permute.xlu0 0
        %334 = vperm.xlu0 %333, %v305
        %v335 = vpop.permute.xlu0 %334
        %v337 = vlaneseq
        %v338 = vshrl.u32 %v337, 7
        %v339 = vsub.s32 0, %v338
        %v340 = vrot.slane %v331, %v339
        %v341 = vmul.f32 %v335, %v340
        %v342 = vadd.f32 %v302, %v341
        %343 = vst [vmem:[%s288] sm:$0xff] %v342
        %v344 = vmul.f32 %v331, %v331
        %v345 = vsub.f32 1.0, %v344
        %347 = vset.pattern.permute.xlu0 0
        %348 = vperm.xlu0 %347, %v307
        %v349 = vpop.permute.xlu0 %348
        %v351 = vlaneseq
        %v352 = vshrl.u32 %v351, 7
        %v353 = vsub.s32 0, %v352
        %v354 = vrot.slane %v349, %v353
        %v355 = vmul.f32 %v345, %v354
        %v356 = vadd.f32 %v355, 1.0
        %v357 = vand.u32 2147483647, %v356
        %v358 = vadd.f32 %v357, 0.0001
        %v359 = vlog2.pop %v358
        %v360 = vmul.f32 %v359, 0.6931472
        %361 = vst [vmem:[%s294] sm:$0x1] %v360
        %s362 = sand.u32 %s173, 1
        %s363 = scalar_lea.sflag [#allocation5], %s362
        %s364 = sand.u32 %s173, 1
        %s365 = smul.addr %s364, 8
        %s366 = scalar_lea.vmem [#allocation4], %s365
        %s367 = sand.u32 %s199, 1
        %s368 = scalar_lea.sflag [#allocation7], %s367
        %s369 = sand.u32 %s199, 1
        %s370 = scalar_lea.vmem [#allocation6], %s369
        // Predicated region
        $region45: #{tpu_custom_call.1} parent=43 // pred_check
          %p371 = pneg %p183
        $region46: #{tpu_custom_call.1} parent=43 // pred_check_branch
          %373 = sbr.rel (%p371) target = $region48
        $region47: #{tpu_custom_call.1} parent=43 // pred_region
          %s375 = ssub.s32 128, 128
          %376 = vsyncadd %s363, %s375
          %s377 = smul.addr %s29, 128
          %s378 = scalar_lea.hbm %s6, %s377
          %s380 = sshll.u32 %s366, 4
          %s381 = int_to_ptr.vmem [resolvable:$true] %s380
          %383 = dma.vmem_to_hbm [thread:$0]  %s381, 128, %s378, %s363
        $region48: #{tpu_custom_call.1} parent=43 // pred_fallthru
          _
        // Predicated region
        $region49: #{tpu_custom_call.1} parent=43 // pred_check
          %p384 = pneg %p209
        $region50: #{tpu_custom_call.1} parent=43 // pred_check_branch
          %386 = sbr.rel (%p384) target = $region52
        $region51: #{tpu_custom_call.1} parent=43 // pred_region
          %s388 = ssub.s32 16, 16
          %389 = vsyncadd %s368, %s388
          %s390 = smul.addr %s29, 16
          %s391 = scalar_lea.hbm %s7, %s390
          %s393 = sshll.u32 %s370, 4
          %s394 = int_to_ptr.vmem [resolvable:$true] %s393
          %396 = dma.vmem_to_hbm [thread:$0]  %s394, 16, %s391, %s368
        $region52: #{tpu_custom_call.1} parent=43 // pred_fallthru
          _
      $region44: #{tpu_custom_call.1} parent=5 // pred_fallthru
        _
      %p397 = scmp.le.s32.totalorder 2, %s24
      // Predicated region
      $region53: #{tpu_custom_call.1} parent=5 // pred_check
        %p398 = pneg %p397
      $region54: #{tpu_custom_call.1} parent=5 // pred_check_branch
        %400 = sbr.rel (%p398) target = $region56
      $region55: #{tpu_custom_call.1} parent=5 // pred_region
        %s401 = ssub.s32 %s24, 2
        // Predicated region
        $region57: #{tpu_custom_call.1} parent=55 // pred_check
          %p402 = pneg %p189
        $region58: #{tpu_custom_call.1} parent=55 // pred_check_branch
          %404 = sbr.rel (%p402) target = $region60
        $region59: #{tpu_custom_call.1} parent=55 // pred_region
          %s405 = sand.u32 %s174, 1
          %s406 = scalar_lea.sflag [#allocation5], %s405
          %s407 = sand.u32 %s174, 1
          %s408 = smul.addr %s407, 8
          %s409 = scalar_lea.vmem [#allocation4], %s408
          %410 = dma.done %s406, 128
        $region60: #{tpu_custom_call.1} parent=55 // pred_fallthru
          _
        // Predicated region
        $region61: #{tpu_custom_call.1} parent=55 // pred_check
          %p411 = pneg %p215
        $region62: #{tpu_custom_call.1} parent=55 // pred_check_branch
          %413 = sbr.rel (%p411) target = $region64
        $region63: #{tpu_custom_call.1} parent=55 // pred_region
          %s414 = sand.u32 %s200, 1
          %s415 = scalar_lea.sflag [#allocation7], %s414
          %s416 = sand.u32 %s200, 1
          %s417 = scalar_lea.vmem [#allocation6], %s416
          %418 = dma.done %s415, 16
        $region64: #{tpu_custom_call.1} parent=55 // pred_fallthru
          _
      $region56: #{tpu_custom_call.1} parent=5 // pred_fallthru
        _
    $region6: #{tpu_custom_call.1} parent=1 // loop_footer
      %s28 = sadd.s32 1, %s24
    $region7: #{tpu_custom_call.1} parent=1 // loop_footer_branch
      %23 = sbr.rel target = $region3
    $region8: #{tpu_custom_call.1} parent=1 // loop_exit
      _
    %419 = vsyncpa [#allocation5], 1
    %s420 = scalar_lea.sflag [#allocation5], 1
    %421 = vsyncpa %s420, 1
    %422 = vsyncpa [#allocation7], 1
    %s423 = scalar_lea.sflag [#allocation7], 1
    %424 = vsyncpa %s423, 1

</llo_original>
